<compile_context>
chip_gen: v6e
topology: v6e:2x2x1
jax: 0.10.0
libtpu: 0.0.40
codegen_flags: <defaults>
</compile_context>

<pallas_src>
import jax
import jax.numpy as jnp
from jax.experimental import pallas as pl
from jax.experimental.pallas import tpu as pltpu

LANE = 128   # lane width (last dim of a vreg)


def _round_up(n, m):
    return ((n + m - 1) // m) * m


def _pad_axis(a, axis, target):
    if a.shape[axis] == target:
        return a
    widths = [(0, 0)] * a.ndim
    widths[axis] = (0, target - a.shape[axis])
    return jnp.pad(a, widths)


def rna_mlp_kernel(x_ref, w1_ref, b1_ref, w2_ref, b2_ref,
                   w3_ref, b3_ref, w4_ref, b4_ref, o_ref):
    def dense(h, w_ref, b_ref):
        # Cast the activation to the weight dtype (bf16 by default) only at the
        # MXU input; accumulate f32; bias-add / ReLU / sigmoid stay f32.
        return jnp.dot(h.astype(w_ref.dtype), w_ref[...],
                       preferred_element_type=jnp.float32) + b_ref[...]

    h = x_ref[...]
    h = jnp.maximum(dense(h, w1_ref, b1_ref), 0.0)
    h = jnp.maximum(dense(h, w2_ref, b2_ref), 0.0)
    h = jnp.maximum(dense(h, w3_ref, b3_ref), 0.0)
    y = dense(h, w4_ref, b4_ref)               # (tb, 128); only column 0 is real
    # Compact lane-dense output: (tb, 1) -> (1, tb//128, 128).  128x less HBM
    # writeback and 128x fewer sigmoid evaluations than storing the padded block.
    o_ref[...] = jax.nn.sigmoid(y[:, :1]).reshape(o_ref.shape)


def _resident_spec(shape):
    """Weights/biases: constant index_map -> resident across grid steps.
    Single-buffered (never re-fetched), halving their VMEM footprint."""
    index_map = lambda i: (0,) * len(shape)
    try:
        return pl.BlockSpec(shape, index_map, pipeline_mode=pl.Buffered(1))
    except Exception:   # very old JAX without pipeline_mode / Buffered
        return pl.BlockSpec(shape, index_map)


def rna_mlp_forward(x, mask, params, *, block_batch=512, dot_dtype=jnp.bfloat16):
    """x: (B, vocab, seq) float; mask unused (parity with the PyTorch forward)."""
    del mask
    B = x.shape[0]
    x2d = x.reshape(B, -1)
    in_dim = x2d.shape[1]
    in_dim_p = _round_up(in_dim, LANE)          # lane-dense K for the first GEMM
    dot_bytes = jnp.dtype(dot_dtype).itemsize

    (w1, b1), (w2, b2), (w3, b3), (w4, b4) = params
    hidden = w1.shape[1]
    hp = _round_up(hidden, LANE)                # lane-dense hidden width
    op = LANE                                   # padded final projection width

    # Zero-pad K / hidden / output dims: every tile is a full vreg, every MXU
    # pass has an aligned K, and the padding is mathematically inert.
    w1p = _pad_axis(_pad_axis(w1, 0, in_dim_p), 1, hp).astype(dot_dtype)
    b1p = _pad_axis(b1, 1, hp).astype(jnp.float32)
    w2p = _pad_axis(_pad_axis(w2, 0, hp), 1, hp).astype(dot_dtype)
    b2p = _pad_axis(b2, 1, hp).astype(jnp.float32)
    w3p = _pad_axis(_pad_axis(w3, 0, hp), 1, hp).astype(dot_dtype)
    b3p = _pad_axis(b3, 1, hp).astype(jnp.float32)
    w4p = _pad_axis(_pad_axis(w4, 0, hp), 1, op).astype(dot_dtype)
    b4p = _pad_axis(b4, 1, op).astype(jnp.float32)

    # Batch tile: multiple of 128 (so the compact output reshape is exact),
    # capped near block_batch, and sized so the grid has >= 2 steps whenever
    # B allows it (v7x megacore) while minimizing batch-padding waste.
    n_blk_target = max(2, pl.cdiv(B, block_batch)) if B > LANE else 1
    tb = _round_up(pl.cdiv(B, n_blk_target), LANE)
    b_pad = _round_up(B, tb)
    num_blocks = b_pad // tb

    x2d = _pad_axis(_pad_axis(x2d, 1, in_dim_p), 0, b_pad).astype(dot_dtype)

    # Explicit VMEM budget: single-buffered weights + double-buffered x/out
    # tiles + f32 intermediates, with headroom.
    w_bytes = (w1p.size + w2p.size + w3p.size + w4p.size) * dot_bytes \
            + (b1p.size + b2p.size + b3p.size + b4p.size) * 4
    io_bytes = 2 * tb * in_dim_p * dot_bytes + 2 * tb * 4
    act_bytes = 4 * tb * hp * 4
    vmem_limit = int(1.25 * (w_bytes + io_bytes + act_bytes)) + (2 << 20)
    vmem_limit = min(max(vmem_limit, 32 << 20), 96 << 20)
    # NOTE: for very large hidden (the two hp x hp weights alone > ~32 MiB) the
    # resident plan no longer fits v7x's 64 MiB VMEM; layers 2/3 would then
    # need a K-tiled reduction grid axis (not needed for this module's sizes).

    flops = 2 * b_pad * (in_dim_p * hp + 2 * hp * hp + hp * op)
    bytes_accessed = x2d.size * dot_bytes + w_bytes + b_pad * 4

    out = pl.pallas_call(
        rna_mlp_kernel,
        out_shape=jax.ShapeDtypeStruct((num_blocks, tb // LANE, LANE), jnp.float32),
        grid=(num_blocks,),
        in_specs=[
            pl.BlockSpec((tb, in_dim_p), lambda i: (i, 0)),   # x tile, pipelined over batch
            _resident_spec((in_dim_p, hp)),
            _resident_spec((1, hp)),
            _resident_spec((hp, hp)),
            _resident_spec((1, hp)),
            _resident_spec((hp, hp)),
            _resident_spec((1, hp)),
            _resident_spec((hp, op)),
            _resident_spec((1, op)),
        ],
        out_specs=pl.BlockSpec((1, tb // LANE, LANE), lambda i: (i, 0, 0)),
        compiler_params=pltpu.CompilerParams(
            dimension_semantics=("parallel",),
            vmem_limit_bytes=vmem_limit,
        ),
        cost_estimate=pl.CostEstimate(
            flops=flops, transcendentals=b_pad, bytes_accessed=bytes_accessed),
    )(x2d, w1p, b1p, w2p, b2p, w3p, b3p, w4p, b4p)

    return out.reshape(b_pad)[:B]   # == .squeeze(-1)


def init_params(key, input_dim, hidden_dim, num_layers=3):
    """Deterministic init matching nn.Linear shapes (uniform +-1/sqrt(fan_in))."""
    params = []
    in_dim = input_dim
    for _ in range(num_layers):
        key, k1, k2 = jax.random.split(key, 3)
        bound = 1.0 / (in_dim ** 0.5)
        w = jax.random.uniform(k1, (in_dim, hidden_dim), jnp.float32, -bound, bound)
        b = jax.random.uniform(k2, (1, hidden_dim), jnp.float32, -bound, bound)
        params.append((w, b))
        in_dim = hidden_dim
    key, k1, k2 = jax.random.split(key, 3)
    bound = 1.0 / (in_dim ** 0.5)
    w = jax.random.uniform(k1, (in_dim, 1), jnp.float32, -bound, bound)
    b = jax.random.uniform(k2, (1, 1), jnp.float32, -bound, bound)
    params.append((w, b))
    return params


if __name__ == "__main__":
    # Small shapes consistent with the module: vocab=5, seq=8, hidden=32, batch=2.
    vocab_size, seq_len, hidden_dim, batch = 5, 8, 32, 2
    key = jax.random.PRNGKey(0)
    kx, kx2, kp = jax.random.split(key, 3)

    x = jax.random.uniform(kx, (batch, vocab_size, seq_len), jnp.float32)
    mask = jnp.ones((batch, seq_len), jnp.float32)   # unused, API parity only
    params = init_params(kp, vocab_size * seq_len, hidden_dim, num_layers=3)

    def ref_forward(xx, prm):
        h = xx.reshape(xx.shape[0], -1)
        for i, (w, b) in enumerate(prm):
            h = h @ w + b
            if i < len(prm) - 1:
                h = jnp.maximum(h, 0.0)
        return jax.nn.sigmoid(h)[:, 0]

    ref = ref_forward(x, params)

    # Default path: bf16 weights / x tile, f32 MXU accumulation.
    out_bf16 = jax.block_until_ready(rna_mlp_forward(x, mask, params))
    assert out_bf16.shape == (batch,), out_bf16.shape
    assert jnp.allclose(out_bf16, ref, atol=3e-2), (out_bf16, ref)

    # Full-f32 path (tighter check of the kernel math itself).
    out_f32 = jax.block_until_ready(
        rna_mlp_forward(x, mask, params, dot_dtype=jnp.float32))
    assert jnp.allclose(out_f32, ref, atol=2e-3), (out_f32, ref)

    # Larger batch: exercises grid > 1 (v7x megacore path) and multi-row
    # compact output blocks.
    batch2 = 300
    xb = jax.random.uniform(kx2, (batch2, vocab_size, seq_len), jnp.float32)
    out_b = jax.block_until_ready(
        rna_mlp_forward(xb, None, params, dot_dtype=jnp.float32))
    assert out_b.shape == (batch2,), out_b.shape
    assert jnp.allclose(out_b, ref_forward(xb, params), atol=2e-3)

    print("KERNEL_OK")
</pallas_src>

<mosaic_0001>
module attributes {stable_mosaic.version = 11 : i64} {
  func.func @rna_mlp_kernel(%arg0: i32, %arg1: memref<128x128xbf16, #tpu.memory_space<vmem>>, %arg2: memref<128x128xbf16, #tpu.memory_space<vmem>>, %arg3: memref<1x128xf32, #tpu.memory_space<vmem>>, %arg4: memref<128x128xbf16, #tpu.memory_space<vmem>>, %arg5: memref<1x128xf32, #tpu.memory_space<vmem>>, %arg6: memref<128x128xbf16, #tpu.memory_space<vmem>>, %arg7: memref<1x128xf32, #tpu.memory_space<vmem>>, %arg8: memref<128x128xbf16, #tpu.memory_space<vmem>>, %arg9: memref<1x128xf32, #tpu.memory_space<vmem>>, %arg10: memref<1x1x128xf32, #tpu.memory_space<vmem>>) attributes {dimension_semantics = [#tpu.dimension_semantics<parallel>], iteration_bounds = array<i64: 1>, scalar_prefetch = 0 : i64, scratch_operands = 0 : i64, tpu.core_type = #tpu.core_type<tc>, window_params = [{transform_indices = @transform_0, window_bounds = array<i64: 128, 128>}, {pipeline_mode = #tpu.pipeline_mode<synchronous>, transform_indices = @transform_1, window_bounds = array<i64: 128, 128>}, {pipeline_mode = #tpu.pipeline_mode<synchronous>, transform_indices = @transform_2, window_bounds = array<i64: 1, 128>}, {pipeline_mode = #tpu.pipeline_mode<synchronous>, transform_indices = @transform_3, window_bounds = array<i64: 128, 128>}, {pipeline_mode = #tpu.pipeline_mode<synchronous>, transform_indices = @transform_4, window_bounds = array<i64: 1, 128>}, {pipeline_mode = #tpu.pipeline_mode<synchronous>, transform_indices = @transform_5, window_bounds = array<i64: 128, 128>}, {pipeline_mode = #tpu.pipeline_mode<synchronous>, transform_indices = @transform_6, window_bounds = array<i64: 1, 128>}, {pipeline_mode = #tpu.pipeline_mode<synchronous>, transform_indices = @transform_7, window_bounds = array<i64: 128, 128>}, {pipeline_mode = #tpu.pipeline_mode<synchronous>, transform_indices = @transform_8, window_bounds = array<i64: 1, 128>}, {transform_indices = @transform_9, window_bounds = array<i64: 1, 1, 128>}]} {
    %c0 = arith.constant 0 : index
    %c0_0 = arith.constant 0 : index
    %0 = vector.load %arg1[%c0, %c0_0] : memref<128x128xbf16, #tpu.memory_space<vmem>>, vector<128x128xbf16>
    %c0_1 = arith.constant 0 : index
    %c0_2 = arith.constant 0 : index
    %1 = vector.load %arg2[%c0_1, %c0_2] : memref<128x128xbf16, #tpu.memory_space<vmem>>, vector<128x128xbf16>
    %cst = arith.constant dense<0.000000e+00> : vector<128x128xf32>
    %2 = tpu.matmul %0, %1, %cst {dimension_numbers = #tpu.dot_dimension_numbers<[1], [0], [0], [1], [0, 0, 1, 1], [], []>} : vector<128x128xbf16>, vector<128x128xbf16>, vector<128x128xf32> -> vector<128x128xf32>
    %c0_3 = arith.constant 0 : index
    %c0_4 = arith.constant 0 : index
    %3 = vector.load %arg3[%c0_3, %c0_4] : memref<1x128xf32, #tpu.memory_space<vmem>>, vector<1x128xf32>
    %4 = vector.broadcast %3 : vector<1x128xf32> to vector<128x128xf32>
    %5 = arith.addf %2, %4 : vector<128x128xf32>
    %cst_5 = arith.constant 0.000000e+00 : f32
    %6 = vector.broadcast %cst_5 : f32 to vector<128x128xf32>
    %7 = arith.maximumf %5, %6 : vector<128x128xf32>
    %8 = arith.truncf %7 : vector<128x128xf32> to vector<128x128xbf16>
    %c0_6 = arith.constant 0 : index
    %c0_7 = arith.constant 0 : index
    %9 = vector.load %arg4[%c0_6, %c0_7] : memref<128x128xbf16, #tpu.memory_space<vmem>>, vector<128x128xbf16>
    %cst_8 = arith.constant dense<0.000000e+00> : vector<128x128xf32>
    %10 = tpu.matmul %8, %9, %cst_8 {dimension_numbers = #tpu.dot_dimension_numbers<[1], [0], [0], [1], [0, 0, 1, 1], [], []>} : vector<128x128xbf16>, vector<128x128xbf16>, vector<128x128xf32> -> vector<128x128xf32>
    %c0_9 = arith.constant 0 : index
    %c0_10 = arith.constant 0 : index
    %11 = vector.load %arg5[%c0_9, %c0_10] : memref<1x128xf32, #tpu.memory_space<vmem>>, vector<1x128xf32>
    %12 = vector.broadcast %11 : vector<1x128xf32> to vector<128x128xf32>
    %13 = arith.addf %10, %12 : vector<128x128xf32>
    %cst_11 = arith.constant 0.000000e+00 : f32
    %14 = vector.broadcast %cst_11 : f32 to vector<128x128xf32>
    %15 = arith.maximumf %13, %14 : vector<128x128xf32>
    %16 = arith.truncf %15 : vector<128x128xf32> to vector<128x128xbf16>
    %c0_12 = arith.constant 0 : index
    %c0_13 = arith.constant 0 : index
    %17 = vector.load %arg6[%c0_12, %c0_13] : memref<128x128xbf16, #tpu.memory_space<vmem>>, vector<128x128xbf16>
    %cst_14 = arith.constant dense<0.000000e+00> : vector<128x128xf32>
    %18 = tpu.matmul %16, %17, %cst_14 {dimension_numbers = #tpu.dot_dimension_numbers<[1], [0], [0], [1], [0, 0, 1, 1], [], []>} : vector<128x128xbf16>, vector<128x128xbf16>, vector<128x128xf32> -> vector<128x128xf32>
    %c0_15 = arith.constant 0 : index
    %c0_16 = arith.constant 0 : index
    %19 = vector.load %arg7[%c0_15, %c0_16] : memref<1x128xf32, #tpu.memory_space<vmem>>, vector<1x128xf32>
    %20 = vector.broadcast %19 : vector<1x128xf32> to vector<128x128xf32>
    %21 = arith.addf %18, %20 : vector<128x128xf32>
    %cst_17 = arith.constant 0.000000e+00 : f32
    %22 = vector.broadcast %cst_17 : f32 to vector<128x128xf32>
    %23 = arith.maximumf %21, %22 : vector<128x128xf32>
    %24 = arith.truncf %23 : vector<128x128xf32> to vector<128x128xbf16>
    %c0_18 = arith.constant 0 : index
    %c0_19 = arith.constant 0 : index
    %25 = vector.load %arg8[%c0_18, %c0_19] : memref<128x128xbf16, #tpu.memory_space<vmem>>, vector<128x128xbf16>
    %cst_20 = arith.constant dense<0.000000e+00> : vector<128x128xf32>
    %26 = tpu.matmul %24, %25, %cst_20 {dimension_numbers = #tpu.dot_dimension_numbers<[1], [0], [0], [1], [0, 0, 1, 1], [], []>} : vector<128x128xbf16>, vector<128x128xbf16>, vector<128x128xf32> -> vector<128x128xf32>
    %c0_21 = arith.constant 0 : index
    %c0_22 = arith.constant 0 : index
    %27 = vector.load %arg9[%c0_21, %c0_22] : memref<1x128xf32, #tpu.memory_space<vmem>>, vector<1x128xf32>
    %28 = vector.broadcast %27 : vector<1x128xf32> to vector<128x128xf32>
    %29 = arith.addf %26, %28 : vector<128x128xf32>
    %30 = vector.extract_strided_slice %29 {offsets = [0, 0], sizes = [128, 1], strides = [1, 1]} : vector<128x128xf32> to vector<128x1xf32>
    %31 = arith.negf %30 : vector<128x1xf32>
    %32 = math.exp %31 : vector<128x1xf32>
    %cst_23 = arith.constant 1.000000e+00 : f32
    %33 = vector.broadcast %cst_23 : f32 to vector<128x1xf32>
    %34 = arith.addf %33, %32 : vector<128x1xf32>
    %35 = arith.divf %33, %34 : vector<128x1xf32>
    %36 = vector.shape_cast %35 : vector<128x1xf32> to vector<1x1x128xf32>
    %c0_24 = arith.constant 0 : index
    %c0_25 = arith.constant 0 : index
    %c0_26 = arith.constant 0 : index
    %37 = vector.load %arg10[%c0_24, %c0_25, %c0_26] : memref<1x1x128xf32, #tpu.memory_space<vmem>>, vector<1x1x128xf32>
    tpu.vector_store %arg10[%c0_24, %c0_25, %c0_26], %36 {strides = array<i32>} : memref<1x1x128xf32, #tpu.memory_space<vmem>>, vector<1x1x128xf32>,
    return
  }
  func.func @transform_0(%arg0: i32) -> (i32, i32) {
    %c0_i32 = arith.constant 0 : i32
    %c0_i32_0 = arith.constant 0 : i32
    return %arg0, %c0_i32 : i32, i32
  }
  func.func @transform_1(%arg0: i32) -> (i32, i32) {
    %c0_i32 = arith.constant 0 : i32
    %c0_i32_0 = arith.constant 0 : i32
    %c0_i32_1 = arith.constant 0 : i32
    return %c0_i32, %c0_i32_0 : i32, i32
  }
  func.func @transform_2(%arg0: i32) -> (i32, i32) {
    %c0_i32 = arith.constant 0 : i32
    %c0_i32_0 = arith.constant 0 : i32
    %c0_i32_1 = arith.constant 0 : i32
    return %c0_i32, %c0_i32_0 : i32, i32
  }
  func.func @transform_3(%arg0: i32) -> (i32, i32) {
    %c0_i32 = arith.constant 0 : i32
    %c0_i32_0 = arith.constant 0 : i32
    %c0_i32_1 = arith.constant 0 : i32
    return %c0_i32, %c0_i32_0 : i32, i32
  }
  func.func @transform_4(%arg0: i32) -> (i32, i32) {
    %c0_i32 = arith.constant 0 : i32
    %c0_i32_0 = arith.constant 0 : i32
    %c0_i32_1 = arith.constant 0 : i32
    return %c0_i32, %c0_i32_0 : i32, i32
  }
  func.func @transform_5(%arg0: i32) -> (i32, i32) {
    %c0_i32 = arith.constant 0 : i32
    %c0_i32_0 = arith.constant 0 : i32
    %c0_i32_1 = arith.constant 0 : i32
    return %c0_i32, %c0_i32_0 : i32, i32
  }
  func.func @transform_6(%arg0: i32) -> (i32, i32) {
    %c0_i32 = arith.constant 0 : i32
    %c0_i32_0 = arith.constant 0 : i32
    %c0_i32_1 = arith.constant 0 : i32
    return %c0_i32, %c0_i32_0 : i32, i32
  }
  func.func @transform_7(%arg0: i32) -> (i32, i32) {
    %c0_i32 = arith.constant 0 : i32
    %c0_i32_0 = arith.constant 0 : i32
    %c0_i32_1 = arith.constant 0 : i32
    return %c0_i32, %c0_i32_0 : i32, i32
  }
  func.func @transform_8(%arg0: i32) -> (i32, i32) {
    %c0_i32 = arith.constant 0 : i32
    %c0_i32_0 = arith.constant 0 : i32
    %c0_i32_1 = arith.constant 0 : i32
    return %c0_i32, %c0_i32_0 : i32, i32
  }
  func.func @transform_9(%arg0: i32) -> (i32, i32, i32) {
    %c0_i32 = arith.constant 0 : i32
    %c0_i32_0 = arith.constant 0 : i32
    %c0_i32_1 = arith.constant 0 : i32
    return %arg0, %c0_i32, %c0_i32_0 : i32, i32, i32
  }
}

</mosaic_0001>

<llo_original>
// kernel: tpu_custom_call.1
$region0: #{tpu_custom_call.1}
  #allocation0 [shape = 'u32[]', space=smem, size = 0x4, offset = 0x4, fixed_abs, tag = 'smem constant byte address 0x4 - core index']
  #allocation1 [shape = 'u32[144,128]{1,0:T(1,128)}', space=vmem, size = 0x12000, scoped, tag = 'internal scratch']
  %s0 = inlined_call_operand.hbm [shape: bf16[128,128], index: 0, kind: input, shape index: {}]
  %s1 = inlined_call_operand.hbm [shape: bf16[128,128], index: 1, kind: input, shape index: {}]
  %s2 = inlined_call_operand.vmem [shape: f32[1,128], index: 2, kind: input, shape index: {}]
  %s3 = inlined_call_operand.hbm [shape: bf16[128,128], index: 3, kind: input, shape index: {}]
  %s4 = inlined_call_operand.vmem [shape: f32[1,128], index: 4, kind: input, shape index: {}]
  %s5 = inlined_call_operand.hbm [shape: bf16[128,128], index: 5, kind: input, shape index: {}]
  %s6 = inlined_call_operand.vmem [shape: f32[1,128], index: 6, kind: input, shape index: {}]
  %s7 = inlined_call_operand.hbm [shape: bf16[128,128], index: 7, kind: input, shape index: {}]
  %s8 = inlined_call_operand.vmem [shape: f32[1,128], index: 8, kind: input, shape index: {}]
  %s9 = inlined_call_operand.hbm [shape: f32[1,1,128], index: 9, kind: output, shape index: {}]
  %s10 = sld [smem:[#allocation0]]
  $region66: #{tpu_custom_call.1} parent=0
    _
  %s12 = ssub.s32 1, %s10
  %s13 = scalar_select 0, %s12, %s10
  $region1: #{tpu_custom_call.1} parent=0
    #allocation2 [shape = 'u8[32768]{0}', space=vmem, size = 0x8000, scoped, tag = 'input window, operand 0, single buffered']
    #allocation3 [shape = 's32[1]{0}', space=sflag, size = 0x4, scoped, tag = 'scoped memory for tpu_custom_call.1']
    #allocation4 [shape = 's32[1]{0}', space=sflag, size = 0x4, scoped, tag = 'scoped memory for tpu_custom_call.1']
    #allocation5 [shape = 'u8[32768]{0}', space=vmem, size = 0x8000, scoped, tag = 'input window, operand 1, single buffered']
    #allocation6 [shape = 's32[1]{0}', space=sflag, size = 0x4, scoped, tag = 'scoped memory for tpu_custom_call.1']
    #allocation7 [shape = 'u8[32768]{0}', space=vmem, size = 0x8000, scoped, tag = 'input window, operand 3, single buffered']
    #allocation8 [shape = 'u8[32768]{0}', space=vmem, size = 0x8000, scoped, tag = 'input window, operand 5, single buffered']
    #allocation9 [shape = 's32[1]{0}', space=sflag, size = 0x4, scoped, tag = 'scoped memory for tpu_custom_call.1']
    #allocation10 [shape = 'u8[32768]{0}', space=vmem, size = 0x8000, scoped, tag = 'input window, operand 7, single buffered']
    #allocation11 [shape = 'u8[512]{0}', space=vmem, size = 0x400, scoped, tag = 'output window, operand 0, single buffered']
    %14 = vsyncpa [#allocation3], 0
    %15 = vsyncpa [#allocation6], 0
    %16 = vsyncpa [#allocation9], 0
    %17 = vsyncpa [#allocation4], 0
    // Predicated region
    $region2: #{tpu_custom_call.1} parent=1 // pred_check
      _
    $region3: #{tpu_custom_call.1} parent=1 // pred_check_branch
      %19 = sbr.rel (0) target = $region5
    $region4: #{tpu_custom_call.1} parent=1 // pred_region
      %s21 = ssub.s32 1024, 1024
      %22 = vsyncadd [#allocation3], %s21
      %s23 = sshll.u32 [#allocation2], 4
      %s24 = int_to_ptr.vmem [resolvable:$true] %s23
      %29 = dma.hbm_to_vmem [thread:$0]  %s0, 1024, %s24, [#allocation3], 64, 64, 4
    $region5: #{tpu_custom_call.1} parent=1 // pred_fallthru
      _
    // Predicated region
    $region6: #{tpu_custom_call.1} parent=1 // pred_check
      _
    $region7: #{tpu_custom_call.1} parent=1 // pred_check_branch
      %31 = sbr.rel (0) target = $region9
    $region8: #{tpu_custom_call.1} parent=1 // pred_region
      %s33 = ssub.s32 1024, 1024
      %34 = vsyncadd [#allocation6], %s33
      %s35 = sshll.u32 [#allocation5], 4
      %s36 = int_to_ptr.vmem [resolvable:$true] %s35
      %41 = dma.hbm_to_vmem [thread:$0]  %s1, 1024, %s36, [#allocation6], 64, 64, 4
    $region9: #{tpu_custom_call.1} parent=1 // pred_fallthru
      _
    // Predicated region
    $region10: #{tpu_custom_call.1} parent=1 // pred_check
      _
    $region11: #{tpu_custom_call.1} parent=1 // pred_check_branch
      %43 = sbr.rel (0) target = $region13
    $region12: #{tpu_custom_call.1} parent=1 // pred_region
      _
    $region13: #{tpu_custom_call.1} parent=1 // pred_fallthru
      _
    // Predicated region
    $region14: #{tpu_custom_call.1} parent=1 // pred_check
      _
    $region15: #{tpu_custom_call.1} parent=1 // pred_check_branch
      %45 = sbr.rel (0) target = $region17
    $region16: #{tpu_custom_call.1} parent=1 // pred_region
      %s47 = ssub.s32 1024, 1024
      %48 = vsyncadd [#allocation6], %s47
      %s49 = sshll.u32 [#allocation7], 4
      %s50 = int_to_ptr.vmem [resolvable:$true] %s49
      %55 = dma.hbm_to_vmem [thread:$0]  %s3, 1024, %s50, [#allocation6], 64, 64, 4
    $region17: #{tpu_custom_call.1} parent=1 // pred_fallthru
      _
    // Predicated region
    $region18: #{tpu_custom_call.1} parent=1 // pred_check
      _
    $region19: #{tpu_custom_call.1} parent=1 // pred_check_branch
      %57 = sbr.rel (0) target = $region21
    $region20: #{tpu_custom_call.1} parent=1 // pred_region
      _
    $region21: #{tpu_custom_call.1} parent=1 // pred_fallthru
      _
    // Predicated region
    $region22: #{tpu_custom_call.1} parent=1 // pred_check
      _
    $region23: #{tpu_custom_call.1} parent=1 // pred_check_branch
      %59 = sbr.rel (0) target = $region25
    $region24: #{tpu_custom_call.1} parent=1 // pred_region
      %s61 = ssub.s32 1024, 1024
      %62 = vsyncadd [#allocation9], %s61
      %s63 = sshll.u32 [#allocation8], 4
      %s64 = int_to_ptr.vmem [resolvable:$true] %s63
      %69 = dma.hbm_to_vmem [thread:$0]  %s5, 1024, %s64, [#allocation9], 64, 64, 4
    $region25: #{tpu_custom_call.1} parent=1 // pred_fallthru
      _
    // Predicated region
    $region26: #{tpu_custom_call.1} parent=1 // pred_check
      _
    $region27: #{tpu_custom_call.1} parent=1 // pred_check_branch
      %71 = sbr.rel (0) target = $region29
    $region28: #{tpu_custom_call.1} parent=1 // pred_region
      _
    $region29: #{tpu_custom_call.1} parent=1 // pred_fallthru
      _
    // Predicated region
    $region30: #{tpu_custom_call.1} parent=1 // pred_check
      _
    $region31: #{tpu_custom_call.1} parent=1 // pred_check_branch
      %73 = sbr.rel (0) target = $region33
    $region32: #{tpu_custom_call.1} parent=1 // pred_region
      %s75 = ssub.s32 1024, 1024
      %76 = vsyncadd [#allocation9], %s75
      %s77 = sshll.u32 [#allocation10], 4
      %s78 = int_to_ptr.vmem [resolvable:$true] %s77
      %83 = dma.hbm_to_vmem [thread:$0]  %s7, 1024, %s78, [#allocation9], 64, 64, 4
    $region33: #{tpu_custom_call.1} parent=1 // pred_fallthru
      _
    // Predicated region
    $region34: #{tpu_custom_call.1} parent=1 // pred_check
      _
    $region35: #{tpu_custom_call.1} parent=1 // pred_check_branch
      %85 = sbr.rel (0) target = $region37
    $region36: #{tpu_custom_call.1} parent=1 // pred_region
      _
    $region37: #{tpu_custom_call.1} parent=1 // pred_fallthru
      _
    // Predicated region
    $region38: #{tpu_custom_call.1} parent=1 // pred_check
      _
    $region39: #{tpu_custom_call.1} parent=1 // pred_check_branch
      %87 = sbr.rel (0) target = $region41
    $region40: #{tpu_custom_call.1} parent=1 // pred_region
      %88 = dma.done [#allocation3], 1024
    $region41: #{tpu_custom_call.1} parent=1 // pred_fallthru
      _
    // Predicated region
    $region42: #{tpu_custom_call.1} parent=1 // pred_check
      _
    $region43: #{tpu_custom_call.1} parent=1 // pred_check_branch
      %90 = sbr.rel (0) target = $region45
    $region44: #{tpu_custom_call.1} parent=1 // pred_region
      %91 = dma.done [#allocation6], 1024
    $region45: #{tpu_custom_call.1} parent=1 // pred_fallthru
      _
    // Predicated region
    $region46: #{tpu_custom_call.1} parent=1 // pred_check
      _
    $region47: #{tpu_custom_call.1} parent=1 // pred_check_branch
      %93 = sbr.rel (0) target = $region49
    $region48: #{tpu_custom_call.1} parent=1 // pred_region
      %94 = dma.done [#allocation6], 1024
    $region49: #{tpu_custom_call.1} parent=1 // pred_fallthru
      _
    // Predicated region
    $region50: #{tpu_custom_call.1} parent=1 // pred_check
      _
    $region51: #{tpu_custom_call.1} parent=1 // pred_check_branch
      %96 = sbr.rel (0) target = $region53
    $region52: #{tpu_custom_call.1} parent=1 // pred_region
      %97 = dma.done [#allocation9], 1024
    $region53: #{tpu_custom_call.1} parent=1 // pred_fallthru
      _
    // Predicated region
    $region54: #{tpu_custom_call.1} parent=1 // pred_check
      _
    $region55: #{tpu_custom_call.1} parent=1 // pred_check_branch
      %99 = sbr.rel (0) target = $region57
    $region56: #{tpu_custom_call.1} parent=1 // pred_region
      %100 = dma.done [#allocation9], 1024
    $region57: #{tpu_custom_call.1} parent=1 // pred_fallthru
      _
    %v102 = vld [vmem:[#allocation2] sm:$0xf]
    %v103 = vld [vmem:[#allocation2 + $0x4] sm:$0xf]
    %v104 = vld [vmem:[#allocation2 + $0x8] sm:$0xf]
    %v105 = vld [vmem:[#allocation2 + $0xc] sm:$0xf]
    %v106 = vld [vmem:[#allocation2 + $0x10] sm:$0xf]
    %v107 = vld [vmem:[#allocation2 + $0x14] sm:$0xf]
    %v108 = vld [vmem:[#allocation2 + $0x18] sm:$0xf]
    %v109 = vld [vmem:[#allocation2 + $0x1c] sm:$0xf]
    %v110 = vld [vmem:[#allocation2 + $0x20] sm:$0xf]
    %v111 = vld [vmem:[#allocation2 + $0x24] sm:$0xf]
    %v112 = vld [vmem:[#allocation2 + $0x28] sm:$0xf]
    %v113 = vld [vmem:[#allocation2 + $0x2c] sm:$0xf]
    %v114 = vld [vmem:[#allocation2 + $0x30] sm:$0xf]
    %v115 = vld [vmem:[#allocation2 + $0x34] sm:$0xf]
    %v116 = vld [vmem:[#allocation2 + $0x38] sm:$0xf]
    %v117 = vld [vmem:[#allocation2 + $0x3c] sm:$0xf]
    %v118 = vld [vmem:[#allocation5] sm:$0xf]
    %v119 = vld [vmem:[#allocation5 + $0x4] sm:$0xf]
    %v120 = vld [vmem:[#allocation5 + $0x8] sm:$0xf]
    %v121 = vld [vmem:[#allocation5 + $0xc] sm:$0xf]
    %v122 = vld [vmem:[#allocation5 + $0x10] sm:$0xf]
    %v123 = vld [vmem:[#allocation5 + $0x14] sm:$0xf]
    %v124 = vld [vmem:[#allocation5 + $0x18] sm:$0xf]
    %v125 = vld [vmem:[#allocation5 + $0x1c] sm:$0xf]
    %v126 = vld [vmem:[#allocation5 + $0x20] sm:$0xf]
    %v127 = vld [vmem:[#allocation5 + $0x24] sm:$0xf]
    %v128 = vld [vmem:[#allocation5 + $0x28] sm:$0xf]
    %v129 = vld [vmem:[#allocation5 + $0x2c] sm:$0xf]
    %v130 = vld [vmem:[#allocation5 + $0x30] sm:$0xf]
    %v131 = vld [vmem:[#allocation5 + $0x34] sm:$0xf]
    %v132 = vld [vmem:[#allocation5 + $0x38] sm:$0xf]
    %v133 = vld [vmem:[#allocation5 + $0x3c] sm:$0xf]
    %v134 = vld [vmem:[%s2] sm:$0x1]
    %v136 = vlaneseq
    %v137 = vshrl.u32 %v136, 7
    %v138 = vsub.s32 0, %v137
    %v139 = vrot.slane %v134, %v138
    %v157 = vunpack.c.l.b16 %v102
    %v158 = vunpack.c.l.b16 %v103
    %v159 = vunpack.c.l.b16 %v104
    %v160 = vunpack.c.l.b16 %v105
    %v161 = vunpack.c.l.b16 %v106
    %v162 = vunpack.c.l.b16 %v107
    %v163 = vunpack.c.l.b16 %v108
    %v164 = vunpack.c.l.b16 %v109
    %v165 = vunpack.c.l.b16 %v110
    %v166 = vunpack.c.l.b16 %v111
    %v167 = vunpack.c.l.b16 %v112
    %v168 = vunpack.c.l.b16 %v113
    %v169 = vunpack.c.l.b16 %v114
    %v170 = vunpack.c.l.b16 %v115
    %v171 = vunpack.c.l.b16 %v116
    %v172 = vunpack.c.l.b16 %v117
    %v173 = vpack.c.b16 %v158, %v157
    %v174 = vpack.c.b16 %v160, %v159
    %v175 = vpack.c.b16 %v162, %v161
    %v176 = vpack.c.b16 %v164, %v163
    %v177 = vpack.c.b16 %v166, %v165
    %v178 = vpack.c.b16 %v168, %v167
    %v179 = vpack.c.b16 %v170, %v169
    %v180 = vpack.c.b16 %v172, %v171
    %v205 = vunpack.c.l.b16 %v118
    %v206 = vunpack.c.l.b16 %v119
    %v207 = vunpack.c.l.b16 %v120
    %v208 = vunpack.c.l.b16 %v121
    %v209 = vunpack.c.l.b16 %v122
    %v210 = vunpack.c.l.b16 %v123
    %v211 = vunpack.c.l.b16 %v124
    %v212 = vunpack.c.l.b16 %v125
    %v213 = vunpack.c.l.b16 %v126
    %v214 = vunpack.c.l.b16 %v127
    %v215 = vunpack.c.l.b16 %v128
    %v216 = vunpack.c.l.b16 %v129
    %v217 = vunpack.c.l.b16 %v130
    %v218 = vunpack.c.l.b16 %v131
    %v219 = vunpack.c.l.b16 %v132
    %v220 = vunpack.c.l.b16 %v133
    %v221 = vpack.c.b16 %v206, %v205
    %v222 = vpack.c.b16 %v208, %v207
    %v223 = vpack.c.b16 %v210, %v209
    %v224 = vpack.c.b16 %v212, %v211
    %v225 = vpack.c.b16 %v214, %v213
    %v226 = vpack.c.b16 %v216, %v215
    %v227 = vpack.c.b16 %v218, %v217
    %v228 = vpack.c.b16 %v220, %v219
    %237 = vmatprep.subr.bf16.mxu0 0
    %238 = vmatpush1.bf16.msra.mxu0 %v228
    %239 = vmatprep.subr.bf16.mxu0 0
    %240 = vmatpush1.bf16.msra.mxu0 %v227
    %241 = vmatprep.subr.bf16.mxu0 0
    %242 = vmatpush1.bf16.msra.mxu0 %v226
    %243 = vmatprep.subr.bf16.mxu0 0
    %244 = vmatpush1.bf16.msra.mxu0 %v225
    %245 = vmatprep.subr.bf16.mxu0 0
    %246 = vmatpush1.bf16.msra.mxu0 %v224
    %247 = vmatprep.subr.bf16.mxu0 0
    %248 = vmatpush1.bf16.msra.mxu0 %v223
    %249 = vmatprep.subr.bf16.mxu0 0
    %250 = vmatpush1.bf16.msra.mxu0 %v222
    %251 = vmatprep.subr.bf16.mxu0 0
    %252 = vmatpush1.bf16.msra.mxu0 %v221
    %253 = vmatprep.subr.bf16.mxu0 0
    %254 = vmatpush2.bf16.msra.mxu0 0
    %255 = vmatprep.subr.bf16.mxu0 0
    %256 = vmatpush2.bf16.msra.mxu0 0
    %257 = vmatprep.subr.bf16.mxu0 0
    %258 = vmatpush2.bf16.msra.mxu0 0
    %259 = vmatprep.subr.bf16.mxu0 0
    %260 = vmatpush2.bf16.msra.mxu0 0
    %261 = vmatprep.subr.bf16.mxu0 0
    %262 = vmatpush2.bf16.msra.mxu0 0
    %263 = vmatprep.subr.bf16.mxu0 0
    %264 = vmatpush2.bf16.msra.mxu0 0
    %265 = vmatprep.subr.bf16.mxu0 0
    %266 = vmatpush2.bf16.msra.mxu0 0
    %267 = vmatprep.subr.bf16.mxu0 0
    %268 = vmatpush2.bf16.msra.mxu0 0
    %269 = vmatprep.mubr.bf16.mxu0 0
    %270 = vmatmul.mubr.bf16.gmra.mxu0 %v173
    %v271 = vpop.f32.mrf.mxu0
    %v272 = vadd.f32 %v139, %v271
    %v273 = vpop.f32.mrf.mxu0
    %v274 = vpop.f32.mrf.mxu0
    %v275 = vadd.f32 %v139, %v274
    %v276 = vpop.f32.mrf.mxu0
    %277 = vmatprep.mubr.bf16.mxu0 0
    %278 = vmatmul.mubr.bf16.gmra.mxu0 %v174
    %v279 = vpop.f32.mrf.mxu0
    %v280 = vadd.f32 %v139, %v279
    %v281 = vpop.f32.mrf.mxu0
    %v282 = vpop.f32.mrf.mxu0
    %v283 = vadd.f32 %v139, %v282
    %v284 = vpop.f32.mrf.mxu0
    %285 = vmatprep.mubr.bf16.mxu0 0
    %286 = vmatmul.mubr.bf16.gmra.mxu0 %v175
    %v287 = vpop.f32.mrf.mxu0
    %v288 = vadd.f32 %v139, %v287
    %v289 = vpop.f32.mrf.mxu0
    %v290 = vpop.f32.mrf.mxu0
    %v291 = vadd.f32 %v139, %v290
    %v292 = vpop.f32.mrf.mxu0
    %293 = vmatprep.mubr.bf16.mxu0 0
    %294 = vmatmul.mubr.bf16.gmra.mxu0 %v176
    %v295 = vpop.f32.mrf.mxu0
    %v296 = vadd.f32 %v139, %v295
    %v297 = vpop.f32.mrf.mxu0
    %v298 = vpop.f32.mrf.mxu0
    %v299 = vadd.f32 %v139, %v298
    %v300 = vpop.f32.mrf.mxu0
    %301 = vmatprep.mubr.bf16.mxu0 0
    %302 = vmatmul.mubr.bf16.gmra.mxu0 %v177
    %v303 = vpop.f32.mrf.mxu0
    %v304 = vadd.f32 %v139, %v303
    %v305 = vpop.f32.mrf.mxu0
    %v306 = vpop.f32.mrf.mxu0
    %v307 = vadd.f32 %v139, %v306
    %v308 = vpop.f32.mrf.mxu0
    %309 = vmatprep.mubr.bf16.mxu0 0
    %310 = vmatmul.mubr.bf16.gmra.mxu0 %v178
    %v311 = vpop.f32.mrf.mxu0
    %v312 = vadd.f32 %v139, %v311
    %v313 = vpop.f32.mrf.mxu0
    %v314 = vpop.f32.mrf.mxu0
    %v315 = vadd.f32 %v139, %v314
    %v316 = vpop.f32.mrf.mxu0
    %317 = vmatprep.mubr.bf16.mxu0 0
    %318 = vmatmul.mubr.bf16.gmra.mxu0 %v179
    %v319 = vpop.f32.mrf.mxu0
    %v320 = vadd.f32 %v139, %v319
    %v321 = vpop.f32.mrf.mxu0
    %v322 = vpop.f32.mrf.mxu0
    %v323 = vadd.f32 %v139, %v322
    %v324 = vpop.f32.mrf.mxu0
    %325 = vmatprep.mubr.bf16.mxu0 0
    %326 = vmatmul.mubr.bf16.gmra.mxu0 %v180
    %v327 = vpop.f32.mrf.mxu0
    %v328 = vadd.f32 %v139, %v327
    %v329 = vpop.f32.mrf.mxu0
    %v330 = vpop.f32.mrf.mxu0
    %v331 = vadd.f32 %v139, %v330
    %v332 = vpop.f32.mrf.mxu0
    %333 = vdwg.mxu0
    %v334 = vmax.f32 %v272, 0.0
    %v335 = vmax.f32 %v275, 0.0
    %v336 = vmax.f32 %v280, 0.0
    %v337 = vmax.f32 %v283, 0.0
    %v338 = vmax.f32 %v288, 0.0
    %v339 = vmax.f32 %v291, 0.0
    %v340 = vmax.f32 %v296, 0.0
    %v341 = vmax.f32 %v299, 0.0
    %v342 = vmax.f32 %v304, 0.0
    %v343 = vmax.f32 %v307, 0.0
    %v344 = vmax.f32 %v312, 0.0
    %v345 = vmax.f32 %v315, 0.0
    %v346 = vmax.f32 %v320, 0.0
    %v347 = vmax.f32 %v323, 0.0
    %v348 = vmax.f32 %v328, 0.0
    %v349 = vmax.f32 %v331, 0.0
    %v350 = vpack.c.bf16 %v335, %v334
    %v351 = vpack.c.bf16 %v337, %v336
    %v352 = vpack.c.bf16 %v339, %v338
    %v353 = vpack.c.bf16 %v341, %v340
    %v354 = vpack.c.bf16 %v343, %v342
    %v355 = vpack.c.bf16 %v345, %v344
    %v356 = vpack.c.bf16 %v347, %v346
    %v357 = vpack.c.bf16 %v349, %v348
    %v358 = vld [vmem:[#allocation7] sm:$0xf]
    %v359 = vld [vmem:[#allocation7 + $0x4] sm:$0xf]
    %v360 = vld [vmem:[#allocation7 + $0x8] sm:$0xf]
    %v361 = vld [vmem:[#allocation7 + $0xc] sm:$0xf]
    %v362 = vld [vmem:[#allocation7 + $0x10] sm:$0xf]
    %v363 = vld [vmem:[#allocation7 + $0x14] sm:$0xf]
    %v364 = vld [vmem:[#allocation7 + $0x18] sm:$0xf]
    %v365 = vld [vmem:[#allocation7 + $0x1c] sm:$0xf]
    %v366 = vld [vmem:[#allocation7 + $0x20] sm:$0xf]
    %v367 = vld [vmem:[#allocation7 + $0x24] sm:$0xf]
    %v368 = vld [vmem:[#allocation7 + $0x28] sm:$0xf]
    %v369 = vld [vmem:[#allocation7 + $0x2c] sm:$0xf]
    %v370 = vld [vmem:[#allocation7 + $0x30] sm:$0xf]
    %v371 = vld [vmem:[#allocation7 + $0x34] sm:$0xf]
    %v372 = vld [vmem:[#allocation7 + $0x38] sm:$0xf]
    %v373 = vld [vmem:[#allocation7 + $0x3c] sm:$0xf]
    %v374 = vld [vmem:[%s4] sm:$0x1]
    %v376 = vlaneseq
    %v377 = vshrl.u32 %v376, 7
    %v378 = vsub.s32 0, %v377
    %v379 = vrot.slane %v374, %v378
    %v397 = vunpack.c.l.b16 %v358
    %v398 = vunpack.c.l.b16 %v359
    %v399 = vunpack.c.l.b16 %v360
    %v400 = vunpack.c.l.b16 %v361
    %v401 = vunpack.c.l.b16 %v362
    %v402 = vunpack.c.l.b16 %v363
    %v403 = vunpack.c.l.b16 %v364
    %v404 = vunpack.c.l.b16 %v365
    %v405 = vunpack.c.l.b16 %v366
    %v406 = vunpack.c.l.b16 %v367
    %v407 = vunpack.c.l.b16 %v368
    %v408 = vunpack.c.l.b16 %v369
    %v409 = vunpack.c.l.b16 %v370
    %v410 = vunpack.c.l.b16 %v371
    %v411 = vunpack.c.l.b16 %v372
    %v412 = vunpack.c.l.b16 %v373
    %v413 = vpack.c.b16 %v398, %v397
    %v414 = vpack.c.b16 %v400, %v399
    %v415 = vpack.c.b16 %v402, %v401
    %v416 = vpack.c.b16 %v404, %v403
    %v417 = vpack.c.b16 %v406, %v405
    %v418 = vpack.c.b16 %v408, %v407
    %v419 = vpack.c.b16 %v410, %v409
    %v420 = vpack.c.b16 %v412, %v411
    %429 = vmatprep.subr.bf16.mxu0 0
    %430 = vmatpush1.bf16.msra.mxu0 %v420
    %431 = vmatprep.subr.bf16.mxu0 0
    %432 = vmatpush1.bf16.msra.mxu0 %v419
    %433 = vmatprep.subr.bf16.mxu0 0
    %434 = vmatpush1.bf16.msra.mxu0 %v418
    %435 = vmatprep.subr.bf16.mxu0 0
    %436 = vmatpush1.bf16.msra.mxu0 %v417
    %437 = vmatprep.subr.bf16.mxu0 0
    %438 = vmatpush1.bf16.msra.mxu0 %v416
    %439 = vmatprep.subr.bf16.mxu0 0
    %440 = vmatpush1.bf16.msra.mxu0 %v415
    %441 = vmatprep.subr.bf16.mxu0 0
    %442 = vmatpush1.bf16.msra.mxu0 %v414
    %443 = vmatprep.subr.bf16.mxu0 0
    %444 = vmatpush1.bf16.msra.mxu0 %v413
    %445 = vmatprep.subr.bf16.mxu0 0
    %446 = vmatpush2.bf16.msra.mxu0 0
    %447 = vmatprep.subr.bf16.mxu0 0
    %448 = vmatpush2.bf16.msra.mxu0 0
    %449 = vmatprep.subr.bf16.mxu0 0
    %450 = vmatpush2.bf16.msra.mxu0 0
    %451 = vmatprep.subr.bf16.mxu0 0
    %452 = vmatpush2.bf16.msra.mxu0 0
    %453 = vmatprep.subr.bf16.mxu0 0
    %454 = vmatpush2.bf16.msra.mxu0 0
    %455 = vmatprep.subr.bf16.mxu0 0
    %456 = vmatpush2.bf16.msra.mxu0 0
    %457 = vmatprep.subr.bf16.mxu0 0
    %458 = vmatpush2.bf16.msra.mxu0 0
    %459 = vmatprep.subr.bf16.mxu0 0
    %460 = vmatpush2.bf16.msra.mxu0 0
    %461 = vmatprep.mubr.bf16.mxu0 0
    %462 = vmatmul.mubr.bf16.gmra.mxu0 %v350
    %v463 = vpop.f32.mrf.mxu0
    %v464 = vadd.f32 %v379, %v463
    %v465 = vpop.f32.mrf.mxu0
    %v466 = vpop.f32.mrf.mxu0
    %v467 = vadd.f32 %v379, %v466
    %v468 = vpop.f32.mrf.mxu0
    %469 = vmatprep.mubr.bf16.mxu0 0
    %470 = vmatmul.mubr.bf16.gmra.mxu0 %v351
    %v471 = vpop.f32.mrf.mxu0
    %v472 = vadd.f32 %v379, %v471
    %v473 = vpop.f32.mrf.mxu0
    %v474 = vpop.f32.mrf.mxu0
    %v475 = vadd.f32 %v379, %v474
    %v476 = vpop.f32.mrf.mxu0
    %477 = vmatprep.mubr.bf16.mxu0 0
    %478 = vmatmul.mubr.bf16.gmra.mxu0 %v352
    %v479 = vpop.f32.mrf.mxu0
    %v480 = vadd.f32 %v379, %v479
    %v481 = vpop.f32.mrf.mxu0
    %v482 = vpop.f32.mrf.mxu0
    %v483 = vadd.f32 %v379, %v482
    %v484 = vpop.f32.mrf.mxu0
    %485 = vmatprep.mubr.bf16.mxu0 0
    %486 = vmatmul.mubr.bf16.gmra.mxu0 %v353
    %v487 = vpop.f32.mrf.mxu0
    %v488 = vadd.f32 %v379, %v487
    %v489 = vpop.f32.mrf.mxu0
    %v490 = vpop.f32.mrf.mxu0
    %v491 = vadd.f32 %v379, %v490
    %v492 = vpop.f32.mrf.mxu0
    %493 = vmatprep.mubr.bf16.mxu0 0
    %494 = vmatmul.mubr.bf16.gmra.mxu0 %v354
    %v495 = vpop.f32.mrf.mxu0
    %v496 = vadd.f32 %v379, %v495
    %v497 = vpop.f32.mrf.mxu0
    %v498 = vpop.f32.mrf.mxu0
    %v499 = vadd.f32 %v379, %v498
    %v500 = vpop.f32.mrf.mxu0
    %501 = vmatprep.mubr.bf16.mxu0 0
    %502 = vmatmul.mubr.bf16.gmra.mxu0 %v355
    %v503 = vpop.f32.mrf.mxu0
    %v504 = vadd.f32 %v379, %v503
    %v505 = vpop.f32.mrf.mxu0
    %v506 = vpop.f32.mrf.mxu0
    %v507 = vadd.f32 %v379, %v506
    %v508 = vpop.f32.mrf.mxu0
    %509 = vmatprep.mubr.bf16.mxu0 0
    %510 = vmatmul.mubr.bf16.gmra.mxu0 %v356
    %v511 = vpop.f32.mrf.mxu0
    %v512 = vadd.f32 %v379, %v511
    %v513 = vpop.f32.mrf.mxu0
    %v514 = vpop.f32.mrf.mxu0
    %v515 = vadd.f32 %v379, %v514
    %v516 = vpop.f32.mrf.mxu0
    %517 = vmatprep.mubr.bf16.mxu0 0
    %518 = vmatmul.mubr.bf16.gmra.mxu0 %v357
    %v519 = vpop.f32.mrf.mxu0
    %v520 = vadd.f32 %v379, %v519
    %v521 = vpop.f32.mrf.mxu0
    %v522 = vpop.f32.mrf.mxu0
    %v523 = vadd.f32 %v379, %v522
    %v524 = vpop.f32.mrf.mxu0
    %525 = vdwg.mxu0
    %v526 = vmax.f32 %v464, 0.0
    %v527 = vmax.f32 %v467, 0.0
    %v528 = vmax.f32 %v472, 0.0
    %v529 = vmax.f32 %v475, 0.0
    %v530 = vmax.f32 %v480, 0.0
    %v531 = vmax.f32 %v483, 0.0
    %v532 = vmax.f32 %v488, 0.0
    %v533 = vmax.f32 %v491, 0.0
    %v534 = vmax.f32 %v496, 0.0
    %v535 = vmax.f32 %v499, 0.0
    %v536 = vmax.f32 %v504, 0.0
    %v537 = vmax.f32 %v507, 0.0
    %v538 = vmax.f32 %v512, 0.0
    %v539 = vmax.f32 %v515, 0.0
    %v540 = vmax.f32 %v520, 0.0
    %v541 = vmax.f32 %v523, 0.0
    %v542 = vpack.c.bf16 %v527, %v526
    %v543 = vpack.c.bf16 %v529, %v528
    %v544 = vpack.c.bf16 %v531, %v530
    %v545 = vpack.c.bf16 %v533, %v532
    %v546 = vpack.c.bf16 %v535, %v534
    %v547 = vpack.c.bf16 %v537, %v536
    %v548 = vpack.c.bf16 %v539, %v538
    %v549 = vpack.c.bf16 %v541, %v540
    %v550 = vld [vmem:[#allocation8] sm:$0xf]
    %v551 = vld [vmem:[#allocation8 + $0x4] sm:$0xf]
    %v552 = vld [vmem:[#allocation8 + $0x8] sm:$0xf]
    %v553 = vld [vmem:[#allocation8 + $0xc] sm:$0xf]
    %v554 = vld [vmem:[#allocation8 + $0x10] sm:$0xf]
    %v555 = vld [vmem:[#allocation8 + $0x14] sm:$0xf]
    %v556 = vld [vmem:[#allocation8 + $0x18] sm:$0xf]
    %v557 = vld [vmem:[#allocation8 + $0x1c] sm:$0xf]
    %v558 = vld [vmem:[#allocation8 + $0x20] sm:$0xf]
    %v559 = vld [vmem:[#allocation8 + $0x24] sm:$0xf]
    %v560 = vld [vmem:[#allocation8 + $0x28] sm:$0xf]
    %v561 = vld [vmem:[#allocation8 + $0x2c] sm:$0xf]
    %v562 = vld [vmem:[#allocation8 + $0x30] sm:$0xf]
    %v563 = vld [vmem:[#allocation8 + $0x34] sm:$0xf]
    %v564 = vld [vmem:[#allocation8 + $0x38] sm:$0xf]
    %v565 = vld [vmem:[#allocation8 + $0x3c] sm:$0xf]
    %v566 = vld [vmem:[%s6] sm:$0x1]
    %v568 = vlaneseq
    %v569 = vshrl.u32 %v568, 7
    %v570 = vsub.s32 0, %v569
    %v571 = vrot.slane %v566, %v570
    %v589 = vunpack.c.l.b16 %v550
    %v590 = vunpack.c.l.b16 %v551
    %v591 = vunpack.c.l.b16 %v552
    %v592 = vunpack.c.l.b16 %v553
    %v593 = vunpack.c.l.b16 %v554
    %v594 = vunpack.c.l.b16 %v555
    %v595 = vunpack.c.l.b16 %v556
    %v596 = vunpack.c.l.b16 %v557
    %v597 = vunpack.c.l.b16 %v558
    %v598 = vunpack.c.l.b16 %v559
    %v599 = vunpack.c.l.b16 %v560
    %v600 = vunpack.c.l.b16 %v561
    %v601 = vunpack.c.l.b16 %v562
    %v602 = vunpack.c.l.b16 %v563
    %v603 = vunpack.c.l.b16 %v564
    %v604 = vunpack.c.l.b16 %v565
    %v605 = vpack.c.b16 %v590, %v589
    %v606 = vpack.c.b16 %v592, %v591
    %v607 = vpack.c.b16 %v594, %v593
    %v608 = vpack.c.b16 %v596, %v595
    %v609 = vpack.c.b16 %v598, %v597
    %v610 = vpack.c.b16 %v600, %v599
    %v611 = vpack.c.b16 %v602, %v601
    %v612 = vpack.c.b16 %v604, %v603
    %621 = vmatprep.subr.bf16.mxu0 0
    %622 = vmatpush1.bf16.msra.mxu0 %v612
    %623 = vmatprep.subr.bf16.mxu0 0
    %624 = vmatpush1.bf16.msra.mxu0 %v611
    %625 = vmatprep.subr.bf16.mxu0 0
    %626 = vmatpush1.bf16.msra.mxu0 %v610
    %627 = vmatprep.subr.bf16.mxu0 0
    %628 = vmatpush1.bf16.msra.mxu0 %v609
    %629 = vmatprep.subr.bf16.mxu0 0
    %630 = vmatpush1.bf16.msra.mxu0 %v608
    %631 = vmatprep.subr.bf16.mxu0 0
    %632 = vmatpush1.bf16.msra.mxu0 %v607
    %633 = vmatprep.subr.bf16.mxu0 0
    %634 = vmatpush1.bf16.msra.mxu0 %v606
    %635 = vmatprep.subr.bf16.mxu0 0
    %636 = vmatpush1.bf16.msra.mxu0 %v605
    %637 = vmatprep.subr.bf16.mxu0 0
    %638 = vmatpush2.bf16.msra.mxu0 0
    %639 = vmatprep.subr.bf16.mxu0 0
    %640 = vmatpush2.bf16.msra.mxu0 0
    %641 = vmatprep.subr.bf16.mxu0 0
    %642 = vmatpush2.bf16.msra.mxu0 0
    %643 = vmatprep.subr.bf16.mxu0 0
    %644 = vmatpush2.bf16.msra.mxu0 0
    %645 = vmatprep.subr.bf16.mxu0 0
    %646 = vmatpush2.bf16.msra.mxu0 0
    %647 = vmatprep.subr.bf16.mxu0 0
    %648 = vmatpush2.bf16.msra.mxu0 0
    %649 = vmatprep.subr.bf16.mxu0 0
    %650 = vmatpush2.bf16.msra.mxu0 0
    %651 = vmatprep.subr.bf16.mxu0 0
    %652 = vmatpush2.bf16.msra.mxu0 0
    %653 = vmatprep.mubr.bf16.mxu0 0
    %654 = vmatmul.mubr.bf16.gmra.mxu0 %v542
    %v655 = vpop.f32.mrf.mxu0
    %v656 = vadd.f32 %v571, %v655
    %v657 = vpop.f32.mrf.mxu0
    %v658 = vpop.f32.mrf.mxu0
    %v659 = vadd.f32 %v571, %v658
    %v660 = vpop.f32.mrf.mxu0
    %661 = vmatprep.mubr.bf16.mxu0 0
    %662 = vmatmul.mubr.bf16.gmra.mxu0 %v543
    %v663 = vpop.f32.mrf.mxu0
    %v664 = vadd.f32 %v571, %v663
    %v665 = vpop.f32.mrf.mxu0
    %v666 = vpop.f32.mrf.mxu0
    %v667 = vadd.f32 %v571, %v666
    %v668 = vpop.f32.mrf.mxu0
    %669 = vmatprep.mubr.bf16.mxu0 0
    %670 = vmatmul.mubr.bf16.gmra.mxu0 %v544
    %v671 = vpop.f32.mrf.mxu0
    %v672 = vadd.f32 %v571, %v671
    %v673 = vpop.f32.mrf.mxu0
    %v674 = vpop.f32.mrf.mxu0
    %v675 = vadd.f32 %v571, %v674
    %v676 = vpop.f32.mrf.mxu0
    %677 = vmatprep.mubr.bf16.mxu0 0
    %678 = vmatmul.mubr.bf16.gmra.mxu0 %v545
    %v679 = vpop.f32.mrf.mxu0
    %v680 = vadd.f32 %v571, %v679
    %v681 = vpop.f32.mrf.mxu0
    %v682 = vpop.f32.mrf.mxu0
    %v683 = vadd.f32 %v571, %v682
    %v684 = vpop.f32.mrf.mxu0
    %685 = vmatprep.mubr.bf16.mxu0 0
    %686 = vmatmul.mubr.bf16.gmra.mxu0 %v546
    %v687 = vpop.f32.mrf.mxu0
    %v688 = vadd.f32 %v571, %v687
    %v689 = vpop.f32.mrf.mxu0
    %v690 = vpop.f32.mrf.mxu0
    %v691 = vadd.f32 %v571, %v690
    %v692 = vpop.f32.mrf.mxu0
    %693 = vmatprep.mubr.bf16.mxu0 0
    %694 = vmatmul.mubr.bf16.gmra.mxu0 %v547
    %v695 = vpop.f32.mrf.mxu0
    %v696 = vadd.f32 %v571, %v695
    %v697 = vpop.f32.mrf.mxu0
    %v698 = vpop.f32.mrf.mxu0
    %v699 = vadd.f32 %v571, %v698
    %v700 = vpop.f32.mrf.mxu0
    %701 = vmatprep.mubr.bf16.mxu0 0
    %702 = vmatmul.mubr.bf16.gmra.mxu0 %v548
    %v703 = vpop.f32.mrf.mxu0
    %v704 = vadd.f32 %v571, %v703
    %v705 = vpop.f32.mrf.mxu0
    %v706 = vpop.f32.mrf.mxu0
    %v707 = vadd.f32 %v571, %v706
    %v708 = vpop.f32.mrf.mxu0
    %709 = vmatprep.mubr.bf16.mxu0 0
    %710 = vmatmul.mubr.bf16.gmra.mxu0 %v549
    %v711 = vpop.f32.mrf.mxu0
    %v712 = vadd.f32 %v571, %v711
    %v713 = vpop.f32.mrf.mxu0
    %v714 = vpop.f32.mrf.mxu0
    %v715 = vadd.f32 %v571, %v714
    %v716 = vpop.f32.mrf.mxu0
    %717 = vdwg.mxu0
    %v718 = vmax.f32 %v656, 0.0
    %v719 = vmax.f32 %v659, 0.0
    %v720 = vmax.f32 %v664, 0.0
    %v721 = vmax.f32 %v667, 0.0
    %v722 = vmax.f32 %v672, 0.0
    %v723 = vmax.f32 %v675, 0.0
    %v724 = vmax.f32 %v680, 0.0
    %v725 = vmax.f32 %v683, 0.0
    %v726 = vmax.f32 %v688, 0.0
    %v727 = vmax.f32 %v691, 0.0
    %v728 = vmax.f32 %v696, 0.0
    %v729 = vmax.f32 %v699, 0.0
    %v730 = vmax.f32 %v704, 0.0
    %v731 = vmax.f32 %v707, 0.0
    %v732 = vmax.f32 %v712, 0.0
    %v733 = vmax.f32 %v715, 0.0
    %v734 = vpack.c.bf16 %v719, %v718
    %v735 = vpack.c.bf16 %v721, %v720
    %v736 = vpack.c.bf16 %v723, %v722
    %v737 = vpack.c.bf16 %v725, %v724
    %v738 = vpack.c.bf16 %v727, %v726
    %v739 = vpack.c.bf16 %v729, %v728
    %v740 = vpack.c.bf16 %v731, %v730
    %v741 = vpack.c.bf16 %v733, %v732
    %v742 = vld [vmem:[#allocation10] sm:$0xf]
    %v743 = vld [vmem:[#allocation10 + $0x4] sm:$0xf]
    %v744 = vld [vmem:[#allocation10 + $0x8] sm:$0xf]
    %v745 = vld [vmem:[#allocation10 + $0xc] sm:$0xf]
    %v746 = vld [vmem:[#allocation10 + $0x10] sm:$0xf]
    %v747 = vld [vmem:[#allocation10 + $0x14] sm:$0xf]
    %v748 = vld [vmem:[#allocation10 + $0x18] sm:$0xf]
    %v749 = vld [vmem:[#allocation10 + $0x1c] sm:$0xf]
    %v750 = vld [vmem:[#allocation10 + $0x20] sm:$0xf]
    %v751 = vld [vmem:[#allocation10 + $0x24] sm:$0xf]
    %v752 = vld [vmem:[#allocation10 + $0x28] sm:$0xf]
    %v753 = vld [vmem:[#allocation10 + $0x2c] sm:$0xf]
    %v754 = vld [vmem:[#allocation10 + $0x30] sm:$0xf]
    %v755 = vld [vmem:[#allocation10 + $0x34] sm:$0xf]
    %v756 = vld [vmem:[#allocation10 + $0x38] sm:$0xf]
    %v757 = vld [vmem:[#allocation10 + $0x3c] sm:$0xf]
    %v758 = vld [vmem:[%s8] sm:$0x1]
    %v760 = vlaneseq
    %v761 = vshrl.u32 %v760, 7
    %v762 = vsub.s32 0, %v761
    %v763 = vrot.slane %v758, %v762
    %v781 = vunpack.c.l.b16 %v742
    %v782 = vunpack.c.l.b16 %v743
    %v783 = vunpack.c.l.b16 %v744
    %v784 = vunpack.c.l.b16 %v745
    %v785 = vunpack.c.l.b16 %v746
    %v786 = vunpack.c.l.b16 %v747
    %v787 = vunpack.c.l.b16 %v748
    %v788 = vunpack.c.l.b16 %v749
    %v789 = vunpack.c.l.b16 %v750
    %v790 = vunpack.c.l.b16 %v751
    %v791 = vunpack.c.l.b16 %v752
    %v792 = vunpack.c.l.b16 %v753
    %v793 = vunpack.c.l.b16 %v754
    %v794 = vunpack.c.l.b16 %v755
    %v795 = vunpack.c.l.b16 %v756
    %v796 = vunpack.c.l.b16 %v757
    %v797 = vpack.c.b16 %v782, %v781
    %v798 = vpack.c.b16 %v784, %v783
    %v799 = vpack.c.b16 %v786, %v785
    %v800 = vpack.c.b16 %v788, %v787
    %v801 = vpack.c.b16 %v790, %v789
    %v802 = vpack.c.b16 %v792, %v791
    %v803 = vpack.c.b16 %v794, %v793
    %v804 = vpack.c.b16 %v796, %v795
    %813 = vmatprep.subr.bf16.mxu0 0
    %814 = vmatpush1.bf16.msra.mxu0 %v804
    %815 = vmatprep.subr.bf16.mxu0 0
    %816 = vmatpush1.bf16.msra.mxu0 %v803
    %817 = vmatprep.subr.bf16.mxu0 0
    %818 = vmatpush1.bf16.msra.mxu0 %v802
    %819 = vmatprep.subr.bf16.mxu0 0
    %820 = vmatpush1.bf16.msra.mxu0 %v801
    %821 = vmatprep.subr.bf16.mxu0 0
    %822 = vmatpush1.bf16.msra.mxu0 %v800
    %823 = vmatprep.subr.bf16.mxu0 0
    %824 = vmatpush1.bf16.msra.mxu0 %v799
    %825 = vmatprep.subr.bf16.mxu0 0
    %826 = vmatpush1.bf16.msra.mxu0 %v798
    %827 = vmatprep.subr.bf16.mxu0 0
    %828 = vmatpush1.bf16.msra.mxu0 %v797
    %829 = vmatprep.subr.bf16.mxu0 0
    %830 = vmatpush2.bf16.msra.mxu0 0
    %831 = vmatprep.subr.bf16.mxu0 0
    %832 = vmatpush2.bf16.msra.mxu0 0
    %833 = vmatprep.subr.bf16.mxu0 0
    %834 = vmatpush2.bf16.msra.mxu0 0
    %835 = vmatprep.subr.bf16.mxu0 0
    %836 = vmatpush2.bf16.msra.mxu0 0
    %837 = vmatprep.subr.bf16.mxu0 0
    %838 = vmatpush2.bf16.msra.mxu0 0
    %839 = vmatprep.subr.bf16.mxu0 0
    %840 = vmatpush2.bf16.msra.mxu0 0
    %841 = vmatprep.subr.bf16.mxu0 0
    %842 = vmatpush2.bf16.msra.mxu0 0
    %843 = vmatprep.subr.bf16.mxu0 0
    %844 = vmatpush2.bf16.msra.mxu0 0
    %845 = vmatprep.mubr.bf16.mxu0 0
    %846 = vmatmul.mubr.bf16.gmra.mxu0 %v734
    %v847 = vpop.f32.mrf.mxu0
    %v848 = vadd.f32 %v763, %v847
    %v849 = vpop.f32.mrf.mxu0
    %v850 = vpop.f32.mrf.mxu0
    %v851 = vadd.f32 %v763, %v850
    %v852 = vpop.f32.mrf.mxu0
    %853 = vmatprep.mubr.bf16.mxu0 0
    %854 = vmatmul.mubr.bf16.gmra.mxu0 %v735
    %v855 = vpop.f32.mrf.mxu0
    %v856 = vadd.f32 %v763, %v855
    %v857 = vpop.f32.mrf.mxu0
    %v858 = vpop.f32.mrf.mxu0
    %v859 = vadd.f32 %v763, %v858
    %v860 = vpop.f32.mrf.mxu0
    %861 = vmatprep.mubr.bf16.mxu0 0
    %862 = vmatmul.mubr.bf16.gmra.mxu0 %v736
    %v863 = vpop.f32.mrf.mxu0
    %v864 = vadd.f32 %v763, %v863
    %v865 = vpop.f32.mrf.mxu0
    %v866 = vpop.f32.mrf.mxu0
    %v867 = vadd.f32 %v763, %v866
    %v868 = vpop.f32.mrf.mxu0
    %869 = vmatprep.mubr.bf16.mxu0 0
    %870 = vmatmul.mubr.bf16.gmra.mxu0 %v737
    %v871 = vpop.f32.mrf.mxu0
    %v872 = vadd.f32 %v763, %v871
    %v873 = vpop.f32.mrf.mxu0
    %v874 = vpop.f32.mrf.mxu0
    %v875 = vadd.f32 %v763, %v874
    %v876 = vpop.f32.mrf.mxu0
    %877 = vmatprep.mubr.bf16.mxu0 0
    %878 = vmatmul.mubr.bf16.gmra.mxu0 %v738
    %v879 = vpop.f32.mrf.mxu0
    %v880 = vadd.f32 %v763, %v879
    %v881 = vpop.f32.mrf.mxu0
    %v882 = vpop.f32.mrf.mxu0
    %v883 = vadd.f32 %v763, %v882
    %v884 = vpop.f32.mrf.mxu0
    %885 = vmatprep.mubr.bf16.mxu0 0
    %886 = vmatmul.mubr.bf16.gmra.mxu0 %v739
    %v887 = vpop.f32.mrf.mxu0
    %v888 = vadd.f32 %v763, %v887
    %v889 = vpop.f32.mrf.mxu0
    %v890 = vpop.f32.mrf.mxu0
    %v891 = vadd.f32 %v763, %v890
    %v892 = vpop.f32.mrf.mxu0
    %893 = vmatprep.mubr.bf16.mxu0 0
    %894 = vmatmul.mubr.bf16.gmra.mxu0 %v740
    %v895 = vpop.f32.mrf.mxu0
    %v896 = vadd.f32 %v763, %v895
    %v897 = vpop.f32.mrf.mxu0
    %v898 = vpop.f32.mrf.mxu0
    %v899 = vadd.f32 %v763, %v898
    %v900 = vpop.f32.mrf.mxu0
    %901 = vmatprep.mubr.bf16.mxu0 0
    %902 = vmatmul.mubr.bf16.gmra.mxu0 %v741
    %v903 = vpop.f32.mrf.mxu0
    %v904 = vadd.f32 %v763, %v903
    %v905 = vpop.f32.mrf.mxu0
    %v906 = vpop.f32.mrf.mxu0
    %v907 = vadd.f32 %v763, %v906
    %v908 = vpop.f32.mrf.mxu0
    %909 = vdwg.mxu0
    %v910 = vxor.u32 %v848, 2147483648
    %v911 = vxor.u32 %v851, 2147483648
    %v912 = vxor.u32 %v856, 2147483648
    %v913 = vxor.u32 %v859, 2147483648
    %v914 = vxor.u32 %v864, 2147483648
    %v915 = vxor.u32 %v867, 2147483648
    %v916 = vxor.u32 %v872, 2147483648
    %v917 = vxor.u32 %v875, 2147483648
    %v918 = vxor.u32 %v880, 2147483648
    %v919 = vxor.u32 %v883, 2147483648
    %v920 = vxor.u32 %v888, 2147483648
    %v921 = vxor.u32 %v891, 2147483648
    %v922 = vxor.u32 %v896, 2147483648
    %v923 = vxor.u32 %v899, 2147483648
    %v924 = vxor.u32 %v904, 2147483648
    %v925 = vxor.u32 %v907, 2147483648
    %v926 = vmul.f32 %v910, 1.442695
    %v927 = vpow.pop %v926
    %v928 = vmul.f32 %v911, 1.442695
    %v929 = vpow.pop %v928
    %v930 = vmul.f32 %v912, 1.442695
    %v931 = vpow.pop %v930
    %v932 = vmul.f32 %v913, 1.442695
    %v933 = vpow.pop %v932
    %v934 = vmul.f32 %v914, 1.442695
    %v935 = vpow.pop %v934
    %v936 = vmul.f32 %v915, 1.442695
    %v937 = vpow.pop %v936
    %v938 = vmul.f32 %v916, 1.442695
    %v939 = vpow.pop %v938
    %v940 = vmul.f32 %v917, 1.442695
    %v941 = vpow.pop %v940
    %v942 = vmul.f32 %v918, 1.442695
    %v943 = vpow.pop %v942
    %v944 = vmul.f32 %v919, 1.442695
    %v945 = vpow.pop %v944
    %v946 = vmul.f32 %v920, 1.442695
    %v947 = vpow.pop %v946
    %v948 = vmul.f32 %v921, 1.442695
    %v949 = vpow.pop %v948
    %v950 = vmul.f32 %v922, 1.442695
    %v951 = vpow.pop %v950
    %v952 = vmul.f32 %v923, 1.442695
    %v953 = vpow.pop %v952
    %v954 = vmul.f32 %v924, 1.442695
    %v955 = vpow.pop %v954
    %v956 = vmul.f32 %v925, 1.442695
    %v957 = vpow.pop %v956
    %v958 = vadd.f32 %v927, 1.0
    %v959 = vadd.f32 %v929, 1.0
    %v960 = vadd.f32 %v931, 1.0
    %v961 = vadd.f32 %v933, 1.0
    %v962 = vadd.f32 %v935, 1.0
    %v963 = vadd.f32 %v937, 1.0
    %v964 = vadd.f32 %v939, 1.0
    %v965 = vadd.f32 %v941, 1.0
    %v966 = vadd.f32 %v943, 1.0
    %v967 = vadd.f32 %v945, 1.0
    %v968 = vadd.f32 %v947, 1.0
    %v969 = vadd.f32 %v949, 1.0
    %v970 = vadd.f32 %v951, 1.0
    %v971 = vadd.f32 %v953, 1.0
    %v972 = vadd.f32 %v955, 1.0
    %v973 = vadd.f32 %v957, 1.0
    %v974 = vrcp.pop %v958
    %v975 = vmul.f32 1.0, %v974
    %v976 = vrcp.pop %v959
    %v977 = vmul.f32 1.0, %v976
    %v978 = vrcp.pop %v960
    %v979 = vmul.f32 1.0, %v978
    %v980 = vrcp.pop %v961
    %v981 = vmul.f32 1.0, %v980
    %v982 = vrcp.pop %v962
    %v983 = vmul.f32 1.0, %v982
    %v984 = vrcp.pop %v963
    %v985 = vmul.f32 1.0, %v984
    %v986 = vrcp.pop %v964
    %v987 = vmul.f32 1.0, %v986
    %v988 = vrcp.pop %v965
    %v989 = vmul.f32 1.0, %v988
    %v990 = vrcp.pop %v966
    %v991 = vmul.f32 1.0, %v990
    %v992 = vrcp.pop %v967
    %v993 = vmul.f32 1.0, %v992
    %v994 = vrcp.pop %v968
    %v995 = vmul.f32 1.0, %v994
    %v996 = vrcp.pop %v969
    %v997 = vmul.f32 1.0, %v996
    %v998 = vrcp.pop %v970
    %v999 = vmul.f32 1.0, %v998
    %v1000 = vrcp.pop %v971
    %v1001 = vmul.f32 1.0, %v1000
    %v1002 = vrcp.pop %v972
    %v1003 = vmul.f32 1.0, %v1002
    %v1004 = vrcp.pop %v973
    %v1005 = vmul.f32 1.0, %v1004
    %1022 = vset.pattern.permute.xlu0 0
    %1023 = vperm.xlu0 %1022, %v975
    %v1024 = vpop.permute.xlu0 %1023
    %1025 = vset.pattern.permute.xlu0 0
    %1026 = vperm.xlu0 %1025, %v977
    %v1027 = vpop.permute.xlu0 %1026
    %1028 = vset.pattern.permute.xlu0 0
    %1029 = vperm.xlu0 %1028, %v979
    %v1030 = vpop.permute.xlu0 %1029
    %1031 = vset.pattern.permute.xlu0 0
    %1032 = vperm.xlu0 %1031, %v981
    %v1033 = vpop.permute.xlu0 %1032
    %1034 = vset.pattern.permute.xlu0 0
    %1035 = vperm.xlu0 %1034, %v983
    %v1036 = vpop.permute.xlu0 %1035
    %1037 = vset.pattern.permute.xlu0 0
    %1038 = vperm.xlu0 %1037, %v985
    %v1039 = vpop.permute.xlu0 %1038
    %1040 = vset.pattern.permute.xlu0 0
    %1041 = vperm.xlu0 %1040, %v987
    %v1042 = vpop.permute.xlu0 %1041
    %1043 = vset.pattern.permute.xlu0 0
    %1044 = vperm.xlu0 %1043, %v989
    %v1045 = vpop.permute.xlu0 %1044
    %1046 = vset.pattern.permute.xlu0 0
    %1047 = vperm.xlu0 %1046, %v991
    %v1048 = vpop.permute.xlu0 %1047
    %1049 = vset.pattern.permute.xlu0 0
    %1050 = vperm.xlu0 %1049, %v993
    %v1051 = vpop.permute.xlu0 %1050
    %1052 = vset.pattern.permute.xlu0 0
    %1053 = vperm.xlu0 %1052, %v995
    %v1054 = vpop.permute.xlu0 %1053
    %1055 = vset.pattern.permute.xlu0 0
    %1056 = vperm.xlu0 %1055, %v997
    %v1057 = vpop.permute.xlu0 %1056
    %1058 = vset.pattern.permute.xlu0 0
    %1059 = vperm.xlu0 %1058, %v999
    %v1060 = vpop.permute.xlu0 %1059
    %1061 = vset.pattern.permute.xlu0 0
    %1062 = vperm.xlu0 %1061, %v1001
    %v1063 = vpop.permute.xlu0 %1062
    %1064 = vset.pattern.permute.xlu0 0
    %1065 = vperm.xlu0 %1064, %v1003
    %v1066 = vpop.permute.xlu0 %1065
    %1067 = vset.pattern.permute.xlu0 0
    %1068 = vperm.xlu0 %1067, %v1005
    %v1069 = vpop.permute.xlu0 %1068
    %v1070 = vlaneseq
    %v1071 = vand.u32 %v1070, 127
    %v1072 = vlaneseq
    %v1073 = vshrl.u32 %v1072, 7
    %v1074 = vsub.s32 %v1071, %v1073
    %v1075 = vrot.slane %v1024, %v1074
    %v1076 = vadd.s32 %v1071, 4294967288
    %v1077 = vlaneseq
    %v1078 = vshrl.u32 %v1077, 7
    %v1079 = vsub.s32 %v1076, %v1078
    %v1080 = vrot.slane %v1027, %v1079
    %vm1081 = vcmask 130112
    %v1082 = vsel %vm1081, %v1080, %v1075
    %v1083 = vadd.s32 %v1071, 4294967280
    %v1084 = vlaneseq
    %v1085 = vshrl.u32 %v1084, 7
    %v1086 = vsub.s32 %v1083, %v1085
    %v1087 = vrot.slane %v1030, %v1086
    %vm1088 = vcmask 195712
    %v1089 = vsel %vm1088, %v1087, %v1082
    %v1090 = vadd.s32 %v1071, 4294967272
    %v1091 = vlaneseq
    %v1092 = vshrl.u32 %v1091, 7
    %v1093 = vsub.s32 %v1090, %v1092
    %v1094 = vrot.slane %v1033, %v1093
    %vm1095 = vcmask 261312
    %v1096 = vsel %vm1095, %v1094, %v1089
    %v1097 = vadd.s32 %v1071, 4294967264
    %v1098 = vlaneseq
    %v1099 = vshrl.u32 %v1098, 7
    %v1100 = vsub.s32 %v1097, %v1099
    %v1101 = vrot.slane %v1036, %v1100
    %vm1102 = vcmask 326912
    %v1103 = vsel %vm1102, %v1101, %v1096
    %v1104 = vadd.s32 %v1071, 4294967256
    %v1105 = vlaneseq
    %v1106 = vshrl.u32 %v1105, 7
    %v1107 = vsub.s32 %v1104, %v1106
    %v1108 = vrot.slane %v1039, %v1107
    %vm1109 = vcmask 392512
    %v1110 = vsel %vm1109, %v1108, %v1103
    %v1111 = vadd.s32 %v1071, 4294967248
    %v1112 = vlaneseq
    %v1113 = vshrl.u32 %v1112, 7
    %v1114 = vsub.s32 %v1111, %v1113
    %v1115 = vrot.slane %v1042, %v1114
    %vm1116 = vcmask 458112
    %v1117 = vsel %vm1116, %v1115, %v1110
    %v1118 = vadd.s32 %v1071, 4294967240
    %v1119 = vlaneseq
    %v1120 = vshrl.u32 %v1119, 7
    %v1121 = vsub.s32 %v1118, %v1120
    %v1122 = vrot.slane %v1045, %v1121
    %vm1123 = vcmask 523712
    %v1124 = vsel %vm1123, %v1122, %v1117
    %v1125 = vadd.s32 %v1071, 4294967232
    %v1126 = vlaneseq
    %v1127 = vshrl.u32 %v1126, 7
    %v1128 = vsub.s32 %v1125, %v1127
    %v1129 = vrot.slane %v1048, %v1128
    %vm1130 = vcmask 589312
    %v1131 = vsel %vm1130, %v1129, %v1124
    %v1132 = vadd.s32 %v1071, 4294967224
    %v1133 = vlaneseq
    %v1134 = vshrl.u32 %v1133, 7
    %v1135 = vsub.s32 %v1132, %v1134
    %v1136 = vrot.slane %v1051, %v1135
    %vm1137 = vcmask 654912
    %v1138 = vsel %vm1137, %v1136, %v1131
    %v1139 = vadd.s32 %v1071, 4294967216
    %v1140 = vlaneseq
    %v1141 = vshrl.u32 %v1140, 7
    %v1142 = vsub.s32 %v1139, %v1141
    %v1143 = vrot.slane %v1054, %v1142
    %vm1144 = vcmask 720512
    %v1145 = vsel %vm1144, %v1143, %v1138
    %v1146 = vadd.s32 %v1071, 4294967208
    %v1147 = vlaneseq
    %v1148 = vshrl.u32 %v1147, 7
    %v1149 = vsub.s32 %v1146, %v1148
    %v1150 = vrot.slane %v1057, %v1149
    %vm1151 = vcmask 786112
    %v1152 = vsel %vm1151, %v1150, %v1145
    %v1153 = vadd.s32 %v1071, 4294967200
    %v1154 = vlaneseq
    %v1155 = vshrl.u32 %v1154, 7
    %v1156 = vsub.s32 %v1153, %v1155
    %v1157 = vrot.slane %v1060, %v1156
    %vm1158 = vcmask 851712
    %v1159 = vsel %vm1158, %v1157, %v1152
    %v1160 = vadd.s32 %v1071, 4294967192
    %v1161 = vlaneseq
    %v1162 = vshrl.u32 %v1161, 7
    %v1163 = vsub.s32 %v1160, %v1162
    %v1164 = vrot.slane %v1063, %v1163
    %vm1165 = vcmask 917312
    %v1166 = vsel %vm1165, %v1164, %v1159
    %v1167 = vadd.s32 %v1071, 4294967184
    %v1168 = vlaneseq
    %v1169 = vshrl.u32 %v1168, 7
    %v1170 = vsub.s32 %v1167, %v1169
    %v1171 = vrot.slane %v1066, %v1170
    %vm1172 = vcmask 982912
    %v1173 = vsel %vm1172, %v1171, %v1166
    %v1174 = vadd.s32 %v1071, 4294967176
    %v1175 = vlaneseq
    %v1176 = vshrl.u32 %v1175, 7
    %v1177 = vsub.s32 %v1174, %v1176
    %v1178 = vrot.slane %v1069, %v1177
    %vm1179 = vcmask 1048512
    %v1180 = vsel %vm1179, %v1178, %v1173
    %1182 = vst [vmem:[#allocation11] sm:$0x1] %v1180
    // Predicated region
    $region58: #{tpu_custom_call.1} parent=1 // pred_check
      _
    $region59: #{tpu_custom_call.1} parent=1 // pred_check_branch
      %1184 = sbr.rel (0) target = $region61
    $region60: #{tpu_custom_call.1} parent=1 // pred_region
      %s1186 = ssub.s32 16, 16
      %1187 = vsyncadd [#allocation4], %s1186
      %s1189 = sshll.u32 [#allocation11], 4
      %s1190 = int_to_ptr.vmem [resolvable:$true] %s1189
      %1192 = dma.vmem_to_hbm [thread:$0]  %s1190, 16, %s9, [#allocation4]
    $region61: #{tpu_custom_call.1} parent=1 // pred_fallthru
      _
    // Predicated region
    $region62: #{tpu_custom_call.1} parent=1 // pred_check
      _
    $region63: #{tpu_custom_call.1} parent=1 // pred_check_branch
      %1194 = sbr.rel (0) target = $region65
    $region64: #{tpu_custom_call.1} parent=1 // pred_region
      %1195 = dma.done [#allocation4], 16
    $region65: #{tpu_custom_call.1} parent=1 // pred_fallthru
      _
    %1196 = vsyncpa [#allocation3], 1
    %1197 = vsyncpa [#allocation6], 1
    %1198 = vsyncpa [#allocation9], 1
    %1199 = vsyncpa [#allocation4], 1

</llo_original>
